<compile_context>
chip_gen: v6e
topology: v6e:2x2x1
jax: 0.10.0
libtpu: 0.0.40
codegen_flags: <defaults>
</compile_context>

<pallas_src>
import functools
import math

import jax
import jax.numpy as jnp
from jax.experimental import pallas as pl
from jax.experimental.pallas import tpu as pltpu


# ----------------------------- helpers -----------------------------

def _pick_tile(dim, cap, align):
    """Largest tile <= cap that divides dim and is align-aligned; else full dim."""
    if dim <= cap:
        return dim
    for t in range(cap - cap % align, 0, -align):
        if dim % t == 0:
            return t
    return dim


# ----------------------------- fused / tiled linear -----------------------------

def _linear_kernel(x_ref, w_ref, b_ref, o_ref, acc_ref):
    # grid = (P, M//tm, N//tn, K//tk); K (reduction) is last -> iterates fastest.
    kk = pl.program_id(3)

    @pl.when(kk == 0)
    def _():
        acc_ref[...] = jnp.zeros_like(acc_ref)

    # bf16 MXU inputs, f32 accumulation.
    acc_ref[...] += jnp.dot(x_ref[0].astype(jnp.bfloat16),
                            w_ref[0].astype(jnp.bfloat16),
                            preferred_element_type=jnp.float32)

    @pl.when(kk == pl.num_programs(3) - 1)
    def _():
        o_ref[0] = (acc_ref[...] + b_ref[0].astype(jnp.float32)).astype(o_ref.dtype)


def stacked_linear(x, w, b, *, out_dtype=None, tm_cap=512, tn_cap=1024, tk_cap=512):
    """out[p] = x[p or 0] @ w[p] + b[p].

    x: (Px, M, d_in) with Px in {1, P};  w: (P, d_in, d_out);  b: (P, 1, d_out)
    -> (P, M, d_out).   P=3 fuses the Q/K/V projections into one launch.
    """
    Px, M, d_in = x.shape
    P, _, d_out = w.shape
    assert Px in (1, P)
    out_dtype = out_dtype if out_dtype is not None else x.dtype

    tm = _pick_tile(M, tm_cap, 8)
    tn = _pick_tile(d_out, tn_cap, 128)
    tk = _pick_tile(d_in, tk_cap, 128)
    grid = (P, M // tm, d_out // tn, d_in // tk)

    x_map = ((lambda p, m, n, k: (p, m, k)) if Px == P
             else (lambda p, m, n, k: (0, m, k)))

    flops = 2 * P * M * d_out * d_in
    bytes_accessed = int(x.dtype.itemsize * Px * M * d_in
                         + w.dtype.itemsize * P * d_in * d_out
                         + jnp.dtype(out_dtype).itemsize * P * M * d_out
                         + b.dtype.itemsize * P * d_out)

    return pl.pallas_call(
        _linear_kernel,
        out_shape=jax.ShapeDtypeStruct((P, M, d_out), out_dtype),
        grid=grid,
        in_specs=[
            pl.BlockSpec((1, tm, tk), x_map),
            pl.BlockSpec((1, tk, tn), lambda p, m, n, k: (p, k, n)),
            pl.BlockSpec((1, 1, tn), lambda p, m, n, k: (p, 0, n)),
        ],
        out_specs=pl.BlockSpec((1, tm, tn), lambda p, m, n, k: (p, m, n)),
        scratch_shapes=[pltpu.VMEM((tm, tn), jnp.float32)],
        compiler_params=pltpu.CompilerParams(
            dimension_semantics=("parallel", "parallel", "parallel", "arbitrary"),
            vmem_limit_bytes=32 * 1024 * 1024),   # explicit: safe on v7x (64 MiB phys)
        cost_estimate=pl.CostEstimate(flops=flops, transcendentals=0,
                                      bytes_accessed=bytes_accessed),
    )(x, w, b)


# ----------------------------- flash attention (heads on grid) -----------------------------

def _flash_attn_kernel(q_ref, k_ref, v_ref, *rest, masked):
    if masked:
        mask_ref, o_ref, m_sc, l_sc, acc_sc = rest
    else:
        mask_ref = None
        o_ref, m_sc, l_sc, acc_sc = rest

    ki = pl.program_id(3)

    @pl.when(ki == 0)
    def _():
        m_sc[...] = jnp.full(m_sc.shape, -jnp.inf, jnp.float32)
        l_sc[...] = jnp.zeros(l_sc.shape, jnp.float32)
        acc_sc[...] = jnp.zeros(acc_sc.shape, jnp.float32)

    # Contiguous 2-D tiles: head split already done by layout + grid.
    q = q_ref[0, 0, 0].astype(jnp.bfloat16)   # (tq, d_k)  (1/sqrt(d_k) folded into W_q)
    k = k_ref[0, 0, 0].astype(jnp.bfloat16)   # (tk, d_k)
    v = v_ref[0, 0, 0].astype(jnp.bfloat16)   # (tk, d_k)

    # q @ k^T via contracted last dims (no materialized transpose), f32 result.
    s = jax.lax.dot_general(q, k, (((1,), (1,)), ((), ())),
                            preferred_element_type=jnp.float32)          # (tq, tk)
    if masked:
        s = jnp.where(mask_ref[0] != 0, s, -1000000000.0)

    # Online softmax update (numerically stable, matches F.softmax; f32 math).
    m_prev = m_sc[...]                                                    # (tq, 1)
    m_new = jnp.maximum(m_prev, jnp.max(s, axis=-1, keepdims=True))
    alpha = jnp.exp(m_prev - m_new)
    p = jnp.exp(s - m_new)                                                # (tq, tk)

    l_sc[...] = alpha * l_sc[...] + jnp.sum(p, axis=-1, keepdims=True)
    acc_sc[...] = alpha * acc_sc[...] + jax.lax.dot_general(
        p.astype(jnp.bfloat16), v, (((1,), (0,)), ((), ())),
        preferred_element_type=jnp.float32)                               # (tq, d_k)
    m_sc[...] = m_new

    @pl.when(ki == pl.num_programs(3) - 1)
    def _():
        o_ref[0, 0] = (acc_sc[...] * pl.reciprocal(l_sc[...], approx=True)
                       ).astype(o_ref.dtype)


def flash_attention(qkv, mask, *, tq_cap=256, tk_cap=256):
    """qkv: (3, B, H, S, d_k) head-major; mask: (B, S, S) int8 or None.

    Returns ctx: (B, H, S, d_k) in qkv.dtype.
    """
    _, B, H, S, d_k = qkv.shape
    masked = mask is not None
    # dtype-aware alignment: int8 mask sublanes pack 32-deep, lanes need 128.
    tq = _pick_tile(S, tq_cap, 32 if masked else 8)
    tk = _pick_tile(S, tk_cap, 128 if masked else 8)
    grid = (B, H, S // tq, S // tk)

    in_specs = [
        pl.BlockSpec((1, 1, 1, tq, d_k), lambda b, h, qi, ki: (0, b, h, qi, 0)),  # Q
        pl.BlockSpec((1, 1, 1, tk, d_k), lambda b, h, qi, ki: (1, b, h, ki, 0)),  # K
        pl.BlockSpec((1, 1, 1, tk, d_k), lambda b, h, qi, ki: (2, b, h, ki, 0)),  # V
    ]
    args = [qkv, qkv, qkv]
    if masked:
        in_specs.append(pl.BlockSpec((1, tq, tk), lambda b, h, qi, ki: (b, qi, ki)))
        args.append(mask)

    d_model = H * d_k
    itemsize = qkv.dtype.itemsize
    flops = 4 * B * S * S * d_model                     # QK^T + PV
    transcendentals = B * H * S * S                     # exp on the score tiles
    bytes_accessed = int(
        B * S * d_model * itemsize                      # Q read once
        + 2 * B * S * d_model * itemsize * (S // tq)    # K,V re-streamed per q pass
        + B * S * d_model * itemsize                    # output
        + (B * H * S * S if masked else 0))             # int8 mask, re-read per head

    kernel = functools.partial(_flash_attn_kernel, masked=masked)

    return pl.pallas_call(
        kernel,
        out_shape=jax.ShapeDtypeStruct((B, H, S, d_k), qkv.dtype),
        grid=grid,
        in_specs=in_specs,
        out_specs=pl.BlockSpec((1, 1, tq, d_k), lambda b, h, qi, ki: (b, h, qi, 0)),
        scratch_shapes=[
            pltpu.VMEM((tq, 1), jnp.float32),     # running max  m
            pltpu.VMEM((tq, 1), jnp.float32),     # running sum  l
            pltpu.VMEM((tq, d_k), jnp.float32),   # output accumulator
        ],
        compiler_params=pltpu.CompilerParams(
            dimension_semantics=("parallel", "parallel", "parallel", "arbitrary"),
            vmem_limit_bytes=32 * 1024 * 1024),
        cost_estimate=pl.CostEstimate(flops=flops, transcendentals=transcendentals,
                                      bytes_accessed=bytes_accessed),
    )(*args)


# ----------------------------- module wrapper -----------------------------

def init_mha_params(key, h, d_model, dtype=jnp.float32):
    """4 Linear(d_model, d_model) layers, PyTorch-style uniform init.

    Weights are stored as (in, out) so kernels compute y = x @ W + b, and the
    q/k/v weights are stacked on a leading axis for the fused projection.
    """
    assert d_model % h == 0
    bound = 1.0 / math.sqrt(d_model)
    keys = jax.random.split(key, 8)

    def uni(k, shape):
        return jax.random.uniform(k, shape, dtype, minval=-bound, maxval=bound)

    w_q, w_k, w_v, w_o = (uni(keys[i], (d_model, d_model)) for i in range(4))
    b_q, b_k, b_v, b_o = (uni(keys[4 + i], (1, d_model)) for i in range(4))
    return {
        "h": h,
        "d_model": d_model,
        "w_qkv": jnp.stack([w_q, w_k, w_v]),   # (3, d_model, d_model)
        "b_qkv": jnp.stack([b_q, b_k, b_v]),   # (3, 1, d_model)
        "w_o": w_o[None],                      # (1, d_model, d_model)
        "b_o": b_o[None],                      # (1, 1, d_model)
    }


def multi_headed_attention(params, query, key, value, mask=None):
    """query/key/value: (B, S, d_model); mask (optional): broadcastable to (B, S, S)."""
    B, S, d_model = query.shape
    h = params["h"]
    d_k = d_model // h
    scale = 1.0 / math.sqrt(d_k)

    # Fold 1/sqrt(d_k) into the Q projection (one constant-sized op per call);
    # removes the per-step q rescale from the attention kernel.
    qkv_scale = jnp.asarray([scale, 1.0, 1.0], params["w_qkv"].dtype).reshape(3, 1, 1)
    w_qkv = params["w_qkv"] * qkv_scale
    b_qkv = params["b_qkv"] * qkv_scale

    # Fused Q/K/V projection: one pallas_call over stacked weights.  For
    # self-attention (query is key is value) the input is passed once and
    # broadcast through the index_map (x read from HBM once).
    if (key is query) and (value is query):
        x_in = query.reshape(1, B * S, d_model)
    else:
        x_in = jnp.stack([query, key, value]).reshape(3, B * S, d_model)
    qkv = stacked_linear(x_in, w_qkv, b_qkv, out_dtype=jnp.bfloat16)   # (3, B*S, d_model)

    # Head-major relayout (single XLA transpose on bf16 data) so the attention
    # kernel sees contiguous (tile, d_k) tiles and heads ride the grid.
    qkv = qkv.reshape(3, B, S, h, d_k).transpose(0, 1, 3, 2, 4)        # (3, B, h, S, d_k)

    if mask is not None:
        mask_i8 = (jnp.broadcast_to(mask, (B, S, S)) != 0).astype(jnp.int8)
    else:
        mask_i8 = None   # no-mask specialization: no (B,S,S) DMA, no select

    ctx = flash_attention(qkv, mask_i8)                                # (B, h, S, d_k) bf16

    # Merge heads (one transpose back) and apply the output projection.
    ctx = ctx.transpose(0, 2, 1, 3).reshape(1, B * S, d_model)
    out = stacked_linear(ctx, params["w_o"], params["b_o"], out_dtype=jnp.float32)
    return out.reshape(B, S, d_model)


# ----------------------------- pure-JAX reference -----------------------------

def _reference_mha(params, query, key, value, mask=None):
    B, S, d_model = query.shape
    h = params["h"]
    d_k = d_model // h
    w_q, w_k, w_v = params["w_qkv"]
    b_q, b_k, b_v = params["b_qkv"]

    def project(x, w, b):
        y = x.reshape(B * S, d_model) @ w + b
        return y.reshape(B, S, h, d_k).transpose(0, 2, 1, 3)

    q = project(query, w_q, b_q)
    k = project(key, w_k, b_k)
    v = project(value, w_v, b_v)
    scores = jnp.einsum("bhqd,bhkd->bhqk", q, k) / math.sqrt(d_k)
    if mask is not None:
        m = jnp.broadcast_to(mask, (B, S, S))[:, None, :, :]
        scores = jnp.where(m == 0, -1000000000.0, scores)
    p = jax.nn.softmax(scores, axis=-1)
    x = jnp.einsum("bhqk,bhkd->bhqd", p, v)
    x = x.transpose(0, 2, 1, 3).reshape(B * S, h * d_k)
    return (x @ params["w_o"][0] + params["b_o"][0]).reshape(B, S, d_model)


if __name__ == "__main__":
    B, S, d_model, h = 2, 8, 32, 4

    root = jax.random.PRNGKey(0)
    k_params, k_q, k_k, k_v = jax.random.split(root, 4)

    params = init_mha_params(k_params, h, d_model)
    query = jax.random.normal(k_q, (B, S, d_model), jnp.float32)
    key_x = jax.random.normal(k_k, (B, S, d_model), jnp.float32)
    value = jax.random.normal(k_v, (B, S, d_model), jnp.float32)

    # bf16 MXU inputs / bf16 intermediate activations -> slightly looser tolerance.
    ATOL = RTOL = 1e-2

    # --- unmasked, cross-attention (no-mask specialized kernel) ---
    out = jax.block_until_ready(
        multi_headed_attention(params, query, key_x, value, mask=None))
    ref = _reference_mha(params, query, key_x, value, mask=None)
    assert out.shape == (B, S, d_model)
    assert jnp.allclose(out, ref, atol=ATOL, rtol=RTOL), \
        float(jnp.max(jnp.abs(out - ref)))

    # --- causal-masked (int8 mask path) ---
    causal = jnp.tril(jnp.ones((S, S), jnp.int32))[None]   # (1, S, S), broadcasts over batch
    out_m = jax.block_until_ready(
        multi_headed_attention(params, query, key_x, value, mask=causal))
    ref_m = _reference_mha(params, query, key_x, value, mask=causal)
    assert jnp.allclose(out_m, ref_m, atol=ATOL, rtol=RTOL), \
        float(jnp.max(jnp.abs(out_m - ref_m)))

    # --- self-attention (exercises the broadcast x path of the fused projection) ---
    out_s = jax.block_until_ready(
        multi_headed_attention(params, query, query, query, mask=None))
    ref_s = _reference_mha(params, query, query, query, mask=None)
    assert jnp.allclose(out_s, ref_s, atol=ATOL, rtol=RTOL), \
        float(jnp.max(jnp.abs(out_s - ref_s)))

    print("KERNEL_OK")
</pallas_src>

<mosaic_0001>
module attributes {stable_mosaic.version = 11 : i64} {
  func.func @_linear_kernel(%arg0: i32, %arg1: i32, %arg2: i32, %arg3: i32, %arg4: memref<1x16x32xf32, #tpu.memory_space<vmem>>, %arg5: memref<1x32x32xf32, #tpu.memory_space<vmem>>, %arg6: memref<1x1x32xf32, #tpu.memory_space<vmem>>, %arg7: memref<1x16x32xbf16, #tpu.memory_space<vmem>>, %arg8: memref<16x32xf32, #tpu.memory_space<vmem>>) attributes {dimension_semantics = [#tpu.dimension_semantics<parallel>, #tpu.dimension_semantics<parallel>, #tpu.dimension_semantics<parallel>, #tpu.dimension_semantics<arbitrary>], iteration_bounds = array<i64: 3, 1, 1, 1>, scalar_prefetch = 0 : i64, scratch_operands = 1 : i64, tpu.core_type = #tpu.core_type<tc>, window_params = [{transform_indices = @transform_0, window_bounds = array<i64: 1, 16, 32>}, {transform_indices = @transform_1, window_bounds = array<i64: 1, 32, 32>}, {transform_indices = @transform_2, window_bounds = array<i64: 1, 1, 32>}, {transform_indices = @transform_3, window_bounds = array<i64: 1, 16, 32>}]} {
    %c0_i32 = arith.constant 0 : i32
    %0 = arith.cmpi eq, %arg3, %c0_i32 : i32
    %1 = arith.extui %0 : i1 to i32
    %c0_i32_0 = arith.constant 0 : i32
    %2 = arith.cmpi ne, %1, %c0_i32_0 : i32
    scf.if %2 {
      %cst_12 = arith.constant 0.000000e+00 : f32
      %16 = vector.broadcast %cst_12 : f32 to vector<16x32xf32>
      %c0_13 = arith.constant 0 : index
      %c0_14 = arith.constant 0 : index
      %17 = vector.load %arg8[%c0_13, %c0_14] : memref<16x32xf32, #tpu.memory_space<vmem>>, vector<16x32xf32>
      tpu.vector_store %arg8[%c0_13, %c0_14], %16 {strides = array<i32>} : memref<16x32xf32, #tpu.memory_space<vmem>>, vector<16x32xf32>,
    } else {
    }
    %c0 = arith.constant 0 : index
    %c0_1 = arith.constant 0 : index
    %3 = vector.load %arg8[%c0, %c0_1] : memref<16x32xf32, #tpu.memory_space<vmem>>, vector<16x32xf32>
    %c0_2 = arith.constant 0 : index
    %c0_3 = arith.constant 0 : index
    %c0_4 = arith.constant 0 : index
    %4 = vector.load %arg4[%c0_2, %c0_3, %c0_4] : memref<1x16x32xf32, #tpu.memory_space<vmem>>, vector<1x16x32xf32>
    %5 = vector.shape_cast %4 : vector<1x16x32xf32> to vector<16x32xf32>
    %6 = arith.truncf %5 : vector<16x32xf32> to vector<16x32xbf16>
    %c0_5 = arith.constant 0 : index
    %c0_6 = arith.constant 0 : index
    %c0_7 = arith.constant 0 : index
    %7 = vector.load %arg5[%c0_5, %c0_6, %c0_7] : memref<1x32x32xf32, #tpu.memory_space<vmem>>, vector<1x32x32xf32>
    %8 = vector.shape_cast %7 : vector<1x32x32xf32> to vector<32x32xf32>
    %9 = arith.truncf %8 : vector<32x32xf32> to vector<32x32xbf16>
    %cst = arith.constant dense<0.000000e+00> : vector<16x32xf32>
    %10 = tpu.matmul %6, %9, %cst {dimension_numbers = #tpu.dot_dimension_numbers<[1], [0], [0], [1], [0, 0, 1, 1], [], []>} : vector<16x32xbf16>, vector<32x32xbf16>, vector<16x32xf32> -> vector<16x32xf32>
    %11 = arith.addf %3, %10 : vector<16x32xf32>
    %c0_8 = arith.constant 0 : index
    %c0_9 = arith.constant 0 : index
    %12 = vector.load %arg8[%c0_8, %c0_9] : memref<16x32xf32, #tpu.memory_space<vmem>>, vector<16x32xf32>
    tpu.vector_store %arg8[%c0_8, %c0_9], %11 {strides = array<i32>} : memref<16x32xf32, #tpu.memory_space<vmem>>, vector<16x32xf32>,
    %c0_i32_10 = arith.constant 0 : i32
    %13 = arith.cmpi eq, %arg3, %c0_i32_10 : i32
    %14 = arith.extui %13 : i1 to i32
    %c0_i32_11 = arith.constant 0 : i32
    %15 = arith.cmpi ne, %14, %c0_i32_11 : i32
    scf.if %15 {
      %c0_12 = arith.constant 0 : index
      %c0_13 = arith.constant 0 : index
      %16 = vector.load %arg8[%c0_12, %c0_13] : memref<16x32xf32, #tpu.memory_space<vmem>>, vector<16x32xf32>
      %c0_14 = arith.constant 0 : index
      %c0_15 = arith.constant 0 : index
      %c0_16 = arith.constant 0 : index
      %17 = vector.load %arg6[%c0_14, %c0_15, %c0_16] : memref<1x1x32xf32, #tpu.memory_space<vmem>>, vector<1x1x32xf32>
      %18 = vector.shape_cast %17 : vector<1x1x32xf32> to vector<1x32xf32>
      %19 = vector.broadcast %18 : vector<1x32xf32> to vector<16x32xf32>
      %20 = arith.addf %16, %19 : vector<16x32xf32>
      %21 = arith.truncf %20 : vector<16x32xf32> to vector<16x32xbf16>
      %c0_17 = arith.constant 0 : index
      %c0_18 = arith.constant 0 : index
      %c0_19 = arith.constant 0 : index
      %22 = vector.load %arg7[%c0_17, %c0_18, %c0_19] : memref<1x16x32xbf16, #tpu.memory_space<vmem>>, vector<1x16x32xbf16>
      %23 = vector.shape_cast %22 : vector<1x16x32xbf16> to vector<16x32xbf16>
      %24 = vector.shape_cast %21 : vector<16x32xbf16> to vector<1x16x32xbf16>
      tpu.vector_store %arg7[%c0_17, %c0_18, %c0_19], %24 {strides = array<i32>} : memref<1x16x32xbf16, #tpu.memory_space<vmem>>, vector<1x16x32xbf16>,
    } else {
    }
    return
  }
  func.func @transform_0(%arg0: i32, %arg1: i32, %arg2: i32, %arg3: i32) -> (i32, i32, i32) {
    %c0_i32 = arith.constant 0 : i32
    return %arg0, %arg1, %arg3 : i32, i32, i32
  }
  func.func @transform_1(%arg0: i32, %arg1: i32, %arg2: i32, %arg3: i32) -> (i32, i32, i32) {
    %c0_i32 = arith.constant 0 : i32
    return %arg0, %arg3, %arg2 : i32, i32, i32
  }
  func.func @transform_2(%arg0: i32, %arg1: i32, %arg2: i32, %arg3: i32) -> (i32, i32, i32) {
    %c0_i32 = arith.constant 0 : i32
    %c0_i32_0 = arith.constant 0 : i32
    return %arg0, %c0_i32, %arg2 : i32, i32, i32
  }
  func.func @transform_3(%arg0: i32, %arg1: i32, %arg2: i32, %arg3: i32) -> (i32, i32, i32) {
    %c0_i32 = arith.constant 0 : i32
    return %arg0, %arg1, %arg2 : i32, i32, i32
  }
}

</mosaic_0001>

<llo_original>
// kernel: tpu_custom_call.1
$region0: #{tpu_custom_call.1}
  #allocation0 [shape = 'u32[]', space=smem, size = 0x4, offset = 0x4, fixed_abs, tag = 'smem constant byte address 0x4 - core index']
  #allocation1 [shape = 'u32[144,128]{1,0:T(1,128)}', space=vmem, size = 0x12000, scoped, tag = 'internal scratch']
  #allocation2 [shape = 'f32[16,32]{1,0:T(8,128)}', space=vmem, size = 0x2000, scoped, tag = 'scratch operand']
  %s0 = inlined_call_operand.hbm [shape: f32[3,16,32], index: 0, kind: input, shape index: {}]
  %s1 = inlined_call_operand.hbm [shape: f32[3,32,32], index: 1, kind: input, shape index: {}]
  %s2 = inlined_call_operand.vmem [shape: f32[3,1,32], index: 2, kind: input, shape index: {}]
  %s3 = inlined_call_operand.hbm [shape: bf16[3,16,32], index: 3, kind: output, shape index: {}]
  %s4 = sld [smem:[#allocation0]]
  $region61: #{tpu_custom_call.1} parent=0
    _
  %s6 = ssub.s32 1, %s4
  %s7 = scalar_select 0, %s6, %s4
  $region1: #{tpu_custom_call.1} parent=0
    #allocation3 [shape = 'u8[16384]{0}', space=vmem, size = 0x4000, scoped, tag = 'input window, operand 0']
    #allocation4 [shape = 's32[2]{0}', space=sflag, size = 0x8, scoped, tag = 'scoped memory for tpu_custom_call.1']
    #allocation5 [shape = 's32[2]{0}', space=sflag, size = 0x8, scoped, tag = 'scoped memory for tpu_custom_call.1']
    #allocation6 [shape = 'u8[32768]{0}', space=vmem, size = 0x8000, scoped, tag = 'input window, operand 1']
    #allocation7 [shape = 's32[2]{0}', space=sflag, size = 0x8, scoped, tag = 'scoped memory for tpu_custom_call.1']
    #allocation8 [shape = 'u8[8192]{0}', space=vmem, size = 0x2000, scoped, tag = 'output window, operand 0']
    %8 = vsyncpa [#allocation4], 0
    %s9 = scalar_lea.sflag [#allocation4], 1
    %10 = vsyncpa %s9, 0
    %11 = vsyncpa [#allocation7], 0
    %s12 = scalar_lea.sflag [#allocation7], 1
    %13 = vsyncpa %s12, 0
    %14 = vsyncpa [#allocation5], 0
    %s15 = scalar_lea.sflag [#allocation5], 1
    %16 = vsyncpa %s15, 0
    loop: start=0, step=1, limit=5
    $region2: #{tpu_custom_call.1} parent=1 // loop_pre_header
      _
    $region3: #{tpu_custom_call.1} parent=1 // loop_header
      %s18 = sphi 0, %s22
      %p19 = scmp.ge.s32.totalorder %s18, 5
      %s25 = sphi 0, %s51
      %s26 = sphi 0, %s47
      %s27 = sphi 0, %s43
      %s28 = sphi 0, %s39
      %s29 = sphi 0, %s25
      %s30 = sphi 0, %s26
      %s31 = sphi 0, %s27
      %s32 = sphi 0, %s28
      %s33 = sphi 0, %s29
      %s34 = sphi 0, %s30
      %s35 = sphi 0, %s31
      %s36 = sphi 0, %s32
      %s58 = sphi 0, %s60
      %s61 = sphi 0, %s58
      %s62 = sphi 0, %s61
      %s78 = sphi 0, %s62
      %s88 = sphi 0, %s90
      %s91 = sphi 0, %s88
      %s92 = sphi 0, %s91
      %s108 = sphi 0, %s92
      %s116 = sphi 0, %s118
      %s119 = sphi 0, %s116
      %s120 = sphi 0, %s119
      %s136 = sphi 0, %s120
      %s146 = sphi 0, %s148
      %s149 = sphi 0, %s146
      %s150 = sphi 0, %s149
      %s166 = sphi 0, %s150
    $region4: #{tpu_custom_call.1} parent=1 // loop_header_branch
      %21 = sbr.rel (%p19) target = $region8
    $region5: #{tpu_custom_call.1} parent=1 // loop_body
      %s23 = ssub.s32 %s18, 1
      %s24 = ssub.s32 %s18, 2
      %s37 = sadd.s32 1, %s28
      %p38 = scmp.ge.s32.totalorder %s37, 1
      %s39 = scalar_select %p38, 0, %s37
      %s40 = sadd.s32 1, %s27
      %s41 = scalar_select %p38, %s40, %s27
      %p42 = scmp.ge.s32.totalorder %s41, 1
      %s43 = scalar_select %p42, 0, %s41
      %s44 = sadd.s32 1, %s26
      %s45 = scalar_select %p42, %s44, %s26
      %p46 = scmp.ge.s32.totalorder %s45, 1
      %s47 = scalar_select %p46, 0, %s45
      %s48 = sadd.s32 1, %s25
      %s49 = scalar_select %p46, %s48, %s25
      %p50 = scmp.ge.s32.totalorder %s49, 3
      %s51 = scalar_select %p50, 0, %s49
      %s52 = ssub.s32 %s25, %s51
      %s53 = ssub.s32 %s26, %s47
      %s54 = sor.u32 %s52, %s53
      %s55 = ssub.s32 %s28, %s39
      %s56 = sor.u32 %s54, %s55
      %p57 = scmp.eq.s32.totalorder %s56, 0
      %s59 = sadd.s32 %s58, 1
      %s60 = scalar_select %p57, %s58, %s59
      %p63 = pneg %p57
      %p64 = scmp.eq.s32.totalorder %s18, 2
      %p65 = por %p63, %p64
      %p66 = scmp.ne.s32.totalorder %s58, %s61
      %p67 = scmp.eq.s32.totalorder %s18, 0
      %p68 = por %p66, %p67
      %p69 = scmp.ne.s32.totalorder %s58, %s61
      %p70 = scmp.eq.s32.totalorder %s23, 2
      %p71 = por %p69, %p70
      %p72 = scmp.ne.s32.totalorder %s61, %s62
      %p73 = scmp.eq.s32.totalorder %s23, 0
      %p74 = por %p72, %p73
      %p75 = scmp.ne.s32.totalorder %s61, %s62
      %p76 = scmp.eq.s32.totalorder %s24, 2
      %p77 = por %p75, %p76
      %p79 = scmp.ne.s32.totalorder %s62, %s78
      %p80 = scmp.eq.s32.totalorder %s24, 0
      %p81 = por %p79, %p80
      %s82 = ssub.s32 %s25, %s51
      %s83 = ssub.s32 %s28, %s39
      %s84 = sor.u32 %s82, %s83
      %s85 = ssub.s32 %s27, %s43
      %s86 = sor.u32 %s84, %s85
      %p87 = scmp.eq.s32.totalorder %s86, 0
      %s89 = sadd.s32 %s88, 1
      %s90 = scalar_select %p87, %s88, %s89
      %p93 = pneg %p87
      %p94 = scmp.eq.s32.totalorder %s18, 2
      %p95 = por %p93, %p94
      %p96 = scmp.ne.s32.totalorder %s88, %s91
      %p97 = scmp.eq.s32.totalorder %s18, 0
      %p98 = por %p96, %p97
      %p99 = scmp.ne.s32.totalorder %s88, %s91
      %p100 = scmp.eq.s32.totalorder %s23, 2
      %p101 = por %p99, %p100
      %p102 = scmp.ne.s32.totalorder %s91, %s92
      %p103 = scmp.eq.s32.totalorder %s23, 0
      %p104 = por %p102, %p103
      %p105 = scmp.ne.s32.totalorder %s91, %s92
      %p106 = scmp.eq.s32.totalorder %s24, 2
      %p107 = por %p105, %p106
      %p109 = scmp.ne.s32.totalorder %s92, %s108
      %p110 = scmp.eq.s32.totalorder %s24, 0
      %p111 = por %p109, %p110
      %s112 = ssub.s32 %s25, %s51
      %s113 = ssub.s32 %s27, %s43
      %s114 = sor.u32 %s112, %s113
      %p115 = scmp.eq.s32.totalorder %s114, 0
      %s117 = sadd.s32 %s116, 1
      %s118 = scalar_select %p115, %s116, %s117
      %p121 = pneg %p115
      %p122 = scmp.eq.s32.totalorder %s18, 2
      %p123 = por %p121, %p122
      %p124 = scmp.ne.s32.totalorder %s116, %s119
      %p125 = scmp.eq.s32.totalorder %s18, 0
      %p126 = por %p124, %p125
      %p127 = scmp.ne.s32.totalorder %s116, %s119
      %p128 = scmp.eq.s32.totalorder %s23, 2
      %p129 = por %p127, %p128
      %p130 = scmp.ne.s32.totalorder %s119, %s120
      %p131 = scmp.eq.s32.totalorder %s23, 0
      %p132 = por %p130, %p131
      %p133 = scmp.ne.s32.totalorder %s119, %s120
      %p134 = scmp.eq.s32.totalorder %s24, 2
      %p135 = por %p133, %p134
      %p137 = scmp.ne.s32.totalorder %s120, %s136
      %p138 = scmp.eq.s32.totalorder %s24, 0
      %p139 = por %p137, %p138
      %s140 = ssub.s32 %s25, %s51
      %s141 = ssub.s32 %s26, %s47
      %s142 = sor.u32 %s140, %s141
      %s143 = ssub.s32 %s27, %s43
      %s144 = sor.u32 %s142, %s143
      %p145 = scmp.eq.s32.totalorder %s144, 0
      %s147 = sadd.s32 %s146, 1
      %s148 = scalar_select %p145, %s146, %s147
      %p151 = pneg %p145
      %p152 = scmp.eq.s32.totalorder %s18, 2
      %p153 = por %p151, %p152
      %p154 = scmp.ne.s32.totalorder %s146, %s149
      %p155 = scmp.eq.s32.totalorder %s18, 0
      %p156 = por %p154, %p155
      %p157 = scmp.ne.s32.totalorder %s146, %s149
      %p158 = scmp.eq.s32.totalorder %s23, 2
      %p159 = por %p157, %p158
      %p160 = scmp.ne.s32.totalorder %s149, %s150
      %p161 = scmp.eq.s32.totalorder %s23, 0
      %p162 = por %p160, %p161
      %p163 = scmp.ne.s32.totalorder %s149, %s150
      %p164 = scmp.eq.s32.totalorder %s24, 2
      %p165 = por %p163, %p164
      %p167 = scmp.ne.s32.totalorder %s150, %s166
      %p168 = scmp.eq.s32.totalorder %s24, 0
      %p169 = por %p167, %p168
      %p170 = scmp.le.s32.totalorder 1, %s18
      %p171 = scmp.lt.s32.totalorder %s18, 4
      %p172 = pnand %p170, %p171
      %p173 = pneg %p172
      // Predicated region
      $region9: #{tpu_custom_call.1} parent=5 // pred_check
        _
      $region10: #{tpu_custom_call.1} parent=5 // pred_check_branch
        %175 = sbr.rel (%p172) target = $region12
      $region11: #{tpu_custom_call.1} parent=5 // pred_region
        %s176 = ssub.s32 %s18, 1
      $region12: #{tpu_custom_call.1} parent=5 // pred_fallthru
        _
      %p177 = scmp.lt.s32.totalorder %s18, 3
      // Predicated region
      $region13: #{tpu_custom_call.1} parent=5 // pred_check
        %p178 = pneg %p177
      $region14: #{tpu_custom_call.1} parent=5 // pred_check_branch
        %180 = sbr.rel (%p178) target = $region16
      $region15: #{tpu_custom_call.1} parent=5 // pred_region
        // Predicated region
        $region17: #{tpu_custom_call.1} parent=15 // pred_check
          %p181 = pneg %p68
        $region18: #{tpu_custom_call.1} parent=15 // pred_check_branch
          %183 = sbr.rel (%p181) target = $region20
        $region19: #{tpu_custom_call.1} parent=15 // pred_region
          %s184 = sand.u32 %s58, 1
          %s185 = scalar_lea.sflag [#allocation4], %s184
          %s186 = sand.u32 %s58, 1
          %s187 = smul.addr %s186, 16
          %s188 = scalar_lea.vmem [#allocation3], %s187
          %s189 = smul.u32 2, %s26
          %s191 = ssub.s32 256, 256
          %192 = vsyncadd %s185, %s191
          %s193 = sadd.s32 %s28, %s189
          %s194 = smul.addr %s25, 2
          %s195 = sadd.s32 %s193, %s194
          %s196 = smul.addr %s195, 128
          %s197 = scalar_lea.hbm %s0, %s196
          %s198 = sshll.u32 %s188, 4
          %s199 = int_to_ptr.vmem [resolvable:$true] %s198
          %204 = dma.hbm_to_vmem [thread:$0]  %s197, 256, %s199, %s185, 128, 128, 8
        $region20: #{tpu_custom_call.1} parent=15 // pred_fallthru
          _
        // Predicated region
        $region21: #{tpu_custom_call.1} parent=15 // pred_check
          %p205 = pneg %p98
        $region22: #{tpu_custom_call.1} parent=15 // pred_check_branch
          %207 = sbr.rel (%p205) target = $region24
        $region23: #{tpu_custom_call.1} parent=15 // pred_region
          %s208 = sand.u32 %s88, 1
          %s209 = scalar_lea.sflag [#allocation7], %s208
          %s210 = sand.u32 %s88, 1
          %s211 = smul.addr %s210, 32
          %s212 = scalar_lea.vmem [#allocation6], %s211
          %s213 = smul.u32 4, %s28
          %s215 = ssub.s32 512, 512
          %216 = vsyncadd %s209, %s215
          %s217 = sadd.s32 %s27, %s213
          %s218 = smul.addr %s25, 4
          %s219 = sadd.s32 %s217, %s218
          %s220 = smul.addr %s219, 128
          %s221 = scalar_lea.hbm %s1, %s220
          %s222 = sshll.u32 %s212, 4
          %s223 = int_to_ptr.vmem [resolvable:$true] %s222
          %228 = dma.hbm_to_vmem [thread:$0]  %s221, 512, %s223, %s209, 128, 128, 8
        $region24: #{tpu_custom_call.1} parent=15 // pred_fallthru
          _
        // Predicated region
        $region25: #{tpu_custom_call.1} parent=15 // pred_check
          %p229 = pneg %p126
        $region26: #{tpu_custom_call.1} parent=15 // pred_check_branch
          %231 = sbr.rel (%p229) target = $region28
        $region27: #{tpu_custom_call.1} parent=15 // pred_region
          %p232 = scmp.lt.s32.totalorder %s25, 2
          %s233 = scalar_select %p232, %s25, 2
          %p234 = scmp.lt.s32.totalorder %s27, 0
          %s235 = scalar_select %p234, %s27, 0
          %s236 = sadd.s32 %s235, %s233
          %s237 = scalar_lea.vmem %s2, %s236
        $region28: #{tpu_custom_call.1} parent=15 // pred_fallthru
          _
      $region16: #{tpu_custom_call.1} parent=5 // pred_fallthru
        _
      %p238 = scmp.le.s32.totalorder 1, %s18
      %p239 = scmp.lt.s32.totalorder %s18, 4
      %p240 = pnand %p238, %p239
      %p241 = pneg %p240
      // Predicated region
      $region29: #{tpu_custom_call.1} parent=5 // pred_check
        _
      $region30: #{tpu_custom_call.1} parent=5 // pred_check_branch
        %243 = sbr.rel (%p240) target = $region32
      $region31: #{tpu_custom_call.1} parent=5 // pred_region
        %s244 = ssub.s32 %s18, 1
        %s245 = sand.u32 %s61, 1
        %s246 = scalar_lea.sflag [#allocation4], %s245
        %s247 = sand.u32 %s61, 1
        %s248 = smul.addr %s247, 16
        %s249 = scalar_lea.vmem [#allocation3], %s248
        // Predicated region
        $region33: #{tpu_custom_call.1} parent=31 // pred_check
          %p250 = pneg %p74
        $region34: #{tpu_custom_call.1} parent=31 // pred_check_branch
          %252 = sbr.rel (%p250) target = $region36
        $region35: #{tpu_custom_call.1} parent=31 // pred_region
          %253 = dma.done %s246, 256
        $region36: #{tpu_custom_call.1} parent=31 // pred_fallthru
          _
        %s254 = sand.u32 %s91, 1
        %s255 = scalar_lea.sflag [#allocation7], %s254
        %s256 = sand.u32 %s91, 1
        %s257 = smul.addr %s256, 32
        %s258 = scalar_lea.vmem [#allocation6], %s257
        // Predicated region
        $region37: #{tpu_custom_call.1} parent=31 // pred_check
          %p259 = pneg %p104
        $region38: #{tpu_custom_call.1} parent=31 // pred_check_branch
          %261 = sbr.rel (%p259) target = $region40
        $region39: #{tpu_custom_call.1} parent=31 // pred_region
          %262 = dma.done %s255, 512
        $region40: #{tpu_custom_call.1} parent=31 // pred_fallthru
          _
        %s263 = sand.u32 %s61, 1
        %s264 = scalar_lea.sflag [#allocation4], %s263
        %s265 = sand.u32 %s61, 1
        %s266 = smul.addr %s265, 16
        %s267 = scalar_lea.vmem [#allocation3], %s266
        %p268 = pneg %p74
        %p269 = pneg %p71
        %s270 = sand.u32 %s91, 1
        %s271 = scalar_lea.sflag [#allocation7], %s270
        %s272 = sand.u32 %s91, 1
        %s273 = smul.addr %s272, 32
        %s274 = scalar_lea.vmem [#allocation6], %s273
        %p275 = pneg %p104
        %p276 = pneg %p101
        %p277 = scmp.lt.s32.totalorder %s29, 2
        %s278 = scalar_select %p277, %s29, 2
        %p279 = scmp.lt.s32.totalorder %s31, 0
        %s280 = scalar_select %p279, %s31, 0
        %s281 = sadd.s32 %s280, %s278
        %s282 = scalar_lea.vmem %s2, %s281
        %p283 = pneg %p132
        %p284 = pneg %p129
        %p285 = pneg %p162
        %p286 = pneg %p159
        %s287 = sand.u32 %s149, 1
        %s288 = scalar_lea.sflag [#allocation5], %s287
        %s289 = sand.u32 %s149, 1
        %s290 = smul.addr %s289, 8
        %s291 = scalar_lea.vmem [#allocation8], %s290
        %s292 = smul.u32 2, %s30
        %s293 = smul.u32 4, %s32
        %p294 = scmp.lt.s32.totalorder %s29, 2
        %s295 = scalar_select %p294, %s29, 2
        %p296 = scmp.lt.s32.totalorder %s31, 0
        %s297 = scalar_select %p296, %s31, 0
        %s298 = sadd.s32 %s297, %s295
        %s299 = scalar_lea.vmem %s2, %s298
        %s300 = smul.u32 2, %s30
        %p302 = scmp.eq.s32.totalorder %s32, 0
        // Predicated region
        $region41: #{tpu_custom_call.1} parent=31 // pred_check
          %p303 = pneg %p302
        $region42: #{tpu_custom_call.1} parent=31 // pred_check_branch
          %305 = sbr.rel (%p303) target = $region44
        $region43: #{tpu_custom_call.1} parent=31 // pred_region
          %vm306 = vcmask 261120
          %307 = vst.msk [vmem:[#allocation2] sm:$0xff] %vm306, 0.0
          %308 = vst.msk [vmem:[#allocation2 + $0x8] sm:$0xff] %vm306, 0.0
        $region44: #{tpu_custom_call.1} parent=31 // pred_fallthru
          _
        %v309 = vld [vmem:[#allocation2] sm:$0xff]
        %v310 = vld [vmem:[#allocation2 + $0x8] sm:$0xff]
        %v311 = vld [vmem:[%s249] sm:$0xff]
        %v312 = vld [vmem:[%s249 + $0x8] sm:$0xff]
        %v313 = vpack.c.bf16 %v312, %v311
        %v314 = vld [vmem:[%s258] sm:$0xff]
        %v315 = vld [vmem:[%s258 + $0x8] sm:$0xff]
        %v316 = vld [vmem:[%s258 + $0x10] sm:$0xff]
        %v317 = vld [vmem:[%s258 + $0x18] sm:$0xff]
        %v318 = vpack.c.bf16 %v315, %v314
        %v319 = vpack.c.bf16 %v317, %v316
        %vm320 = vcmask 261120
        %v322 = vsel %vm320, %v313, 0
        %324 = vmatprep.subr.bf16.mxu0 0
        %325 = vmatpush1.bf16.msra.mxu0 0
        %326 = vmatprep.subr.bf16.mxu0 0
        %327 = vmatpush1.bf16.msra.mxu0 0
        %328 = vmatprep.subr.bf16.mxu0 0
        %329 = vmatpush1.bf16.msra.mxu0 0
        %330 = vmatprep.subr.bf16.mxu0 0
        %331 = vmatpush1.bf16.msra.mxu0 0
        %332 = vmatprep.subr.bf16.mxu0 0
        %333 = vmatpush1.bf16.msra.mxu0 0
        %334 = vmatprep.subr.bf16.mxu0 0
        %335 = vmatpush1.bf16.msra.mxu0 0
        %336 = vmatprep.subr.bf16.mxu0 0
        %337 = vmatpush1.bf16.msra.mxu0 %v319
        %338 = vmatprep.subr.bf16.mxu0 0
        %339 = vmatpush1.bf16.msra.mxu0 %v318
        %340 = vmatprep.subr.bf16.mxu0 0
        %341 = vmatpush2.bf16.msra.mxu0 0
        %342 = vmatprep.subr.bf16.mxu0 0
        %343 = vmatpush2.bf16.msra.mxu0 0
        %344 = vmatprep.subr.bf16.mxu0 0
        %345 = vmatpush2.bf16.msra.mxu0 0
        %346 = vmatprep.subr.bf16.mxu0 0
        %347 = vmatpush2.bf16.msra.mxu0 0
        %348 = vmatprep.subr.bf16.mxu0 0
        %349 = vmatpush2.bf16.msra.mxu0 0
        %350 = vmatprep.subr.bf16.mxu0 0
        %351 = vmatpush2.bf16.msra.mxu0 0
        %352 = vmatprep.subr.bf16.mxu0 0
        %353 = vmatpush2.bf16.msra.mxu0 0
        %354 = vmatprep.subr.bf16.mxu0 0
        %355 = vmatpush2.bf16.msra.mxu0 0
        %356 = vmatprep.mubr.bf16.mxu0 0
        %357 = vmatmul.mubr.bf16.gmra.mxu0 %v322
        %v358 = vpop.f32.mrf.mxu0
        %v359 = vadd.f32 0.0, %v358
        %v360 = vpop.f32.mrf.mxu0
        %v361 = vpop.f32.mrf.mxu0
        %v362 = vadd.f32 0.0, %v361
        %v363 = vpop.f32.mrf.mxu0
        %364 = vdwg.mxu0
        %v365 = vadd.f32 %v309, %v359
        %v366 = vadd.f32 %v310, %v362
        %367 = vst.msk [vmem:[#allocation2] sm:$0xff] %vm320, %v365
        %368 = vst.msk [vmem:[#allocation2 + $0x8] sm:$0xff] %vm320, %v366
        // Predicated region
        $region45: #{tpu_custom_call.1} parent=31 // pred_check
          %p369 = pneg %p302
        $region46: #{tpu_custom_call.1} parent=31 // pred_check_branch
          %371 = sbr.rel (%p369) target = $region48
        $region47: #{tpu_custom_call.1} parent=31 // pred_region
          %v372 = vld [vmem:[#allocation2] sm:$0xff]
          %v373 = vld [vmem:[#allocation2 + $0x8] sm:$0xff]
          %v374 = vld [vmem:[%s299] sm:$0x1]
          %v376 = vlaneseq
          %v377 = vshrl.u32 %v376, 7
          %v378 = vsub.s32 0, %v377
          %v379 = vrot.slane %v374, %v378
          %v381 = vadd.f32 %v372, %v379
          %v382 = vadd.f32 %v373, %v379
          %v383 = vpack.c.bf16 %v382, %v381
          %v385 = vunpack.c.l.b16 %v383
          %v386 = vunpack.c.h.b16 %v383
          %v387 = vpack.c.b16 %v385, %v385
          %v388 = vpack.c.b16 %v386, %v386
          %vm391 = vcmask 257024
          %392 = vst.msk [vmem:[%s291] sm:$0xf] %vm391, %v387
          %393 = vst.msk [vmem:[%s291 + $0x4] sm:$0xf] %vm391, %v388
        $region48: #{tpu_custom_call.1} parent=31 // pred_fallthru
          _
        %s394 = sand.u32 %s149, 1
        %s395 = scalar_lea.sflag [#allocation5], %s394
        %s396 = sand.u32 %s149, 1
        %s397 = smul.addr %s396, 8
        %s398 = scalar_lea.vmem [#allocation8], %s397
        // Predicated region
        $region49: #{tpu_custom_call.1} parent=31 // pred_check
          %p399 = pneg %p159
        $region50: #{tpu_custom_call.1} parent=31 // pred_check_branch
          %401 = sbr.rel (%p399) target = $region52
        $region51: #{tpu_custom_call.1} parent=31 // pred_region
          %s402 = smul.u32 2, %s30
          %s404 = ssub.s32 128, 128
          %405 = vsyncadd %s395, %s404
          %s406 = sadd.s32 %s31, %s402
          %s407 = smul.addr %s29, 2
          %s408 = sadd.s32 %s406, %s407
          %s409 = smul.addr %s408, 64
          %s410 = scalar_lea.hbm %s3, %s409
          %s411 = sshll.u32 %s398, 4
          %s412 = int_to_ptr.vmem [resolvable:$true] %s411
          %417 = dma.vmem_to_hbm [thread:$0]  %s412, 128, %s410, %s395, 64, 64, 4
        $region52: #{tpu_custom_call.1} parent=31 // pred_fallthru
          _
      $region32: #{tpu_custom_call.1} parent=5 // pred_fallthru
        _
      %p418 = scmp.le.s32.totalorder 2, %s18
      // Predicated region
      $region53: #{tpu_custom_call.1} parent=5 // pred_check
        %p419 = pneg %p418
      $region54: #{tpu_custom_call.1} parent=5 // pred_check_branch
        %421 = sbr.rel (%p419) target = $region56
      $region55: #{tpu_custom_call.1} parent=5 // pred_region
        %s422 = ssub.s32 %s18, 2
        // Predicated region
        $region57: #{tpu_custom_call.1} parent=55 // pred_check
          %p423 = pneg %p165
        $region58: #{tpu_custom_call.1} parent=55 // pred_check_branch
          %425 = sbr.rel (%p423) target = $region60
        $region59: #{tpu_custom_call.1} parent=55 // pred_region
          %s426 = sand.u32 %s150, 1
          %s427 = scalar_lea.sflag [#allocation5], %s426
          %s428 = sand.u32 %s150, 1
          %s429 = smul.addr %s428, 8
          %s430 = scalar_lea.vmem [#allocation8], %s429
          %431 = dma.done %s427, 128
        $region60: #{tpu_custom_call.1} parent=55 // pred_fallthru
          _
      $region56: #{tpu_custom_call.1} parent=5 // pred_fallthru
        _
    $region6: #{tpu_custom_call.1} parent=1 // loop_footer
      %s22 = sadd.s32 1, %s18
    $region7: #{tpu_custom_call.1} parent=1 // loop_footer_branch
      %17 = sbr.rel target = $region3
    $region8: #{tpu_custom_call.1} parent=1 // loop_exit
      _
    %432 = vsyncpa [#allocation4], 1
    %s433 = scalar_lea.sflag [#allocation4], 1
    %434 = vsyncpa %s433, 1
    %435 = vsyncpa [#allocation7], 1
    %s436 = scalar_lea.sflag [#allocation7], 1
    %437 = vsyncpa %s436, 1
    %438 = vsyncpa [#allocation5], 1
    %s439 = scalar_lea.sflag [#allocation5], 1
    %440 = vsyncpa %s439, 1

</llo_original>
